<compile_context>
chip_gen: v5e
topology: v5e:2x2
jax: 0.10.0
libtpu: 0.0.40
codegen_flags: <defaults>
</compile_context>

<pallas_src>
import functools

import jax
import jax.numpy as jnp
from jax.experimental import pallas as pl
from jax.experimental.pallas import tpu as pltpu

LANE = 128
SUBLANE = 8
TILE_M_MAX = 2048  # rows per tile: 2048 * 128 * 4B = 1 MiB per f32 input tile


def _round_up(x, m):
    return ((x + m - 1) // m) * m


def _composite_loss_kernel(p_ref, t_ref, sq_ref, ab_ref, *,
                           tile_m, total_rows, tiles_per_core, need_mask):
    """Accumulate elementwise (p-t)^2 and |p-t| into (1, 8, 128) partials."""

    @pl.when(pl.program_id(1) == 0)
    def _():
        sq_ref[...] = jnp.zeros_like(sq_ref)
        ab_ref[...] = jnp.zeros_like(ab_ref)

    d = p_ref[...].astype(jnp.float32) - t_ref[...].astype(jnp.float32)

    if need_mask:
        # Zero rows beyond the real array (ragged last tile / redundant
        # clamped tile). Mask before squaring so unspecified data in the
        # padded region can never propagate.
        block_idx = pl.program_id(0) * tiles_per_core + pl.program_id(1)
        row_start = block_idx * tile_m
        row_idx = row_start + jax.lax.broadcasted_iota(jnp.int32, d.shape, 0)
        d = jnp.where(row_idx < total_rows, d, 0.0)

    # (tile_m, 128) -> (tile_m // 8, 8, 128): splits exactly on (8,128) vreg
    # boundaries (layout-free reshape); the axis-0 sum is pure VPU vreg adds,
    # keeping the XLU cross-lane reduce out of the hot loop entirely.
    d3 = d.reshape(tile_m // SUBLANE, SUBLANE, LANE)
    sq_ref[...] += jnp.sum(d3 * d3, axis=0, keepdims=True)
    ab_ref[...] += jnp.sum(jnp.abs(d3), axis=0, keepdims=True)


@functools.partial(jax.jit, static_argnames=("weights", "tile_m_max"))
def composite_loss(pred, target, weights=(0.7, 0.3), tile_m_max=TILE_M_MAX):
    """weights[0] * MSE(pred, target) + weights[1] * MAE(pred, target)."""
    assert pred.shape == target.shape
    assert tile_m_max % SUBLANE == 0
    n_elems = pred.size

    flat_p = pred.reshape(-1)
    flat_t = target.reshape(-1)

    pad = (-n_elems) % LANE
    if pad:
        # Only hit when the element count is not a multiple of 128 (rare for
        # NCHW image tensors). Zero padding contributes 0 to both sums; pad
        # straight to an (8,128) multiple so rows stay sublane-aligned.
        pad = _round_up(n_elems, SUBLANE * LANE) - n_elems
        flat_p = jnp.pad(flat_p, (0, pad))
        flat_t = jnp.pad(flat_t, (0, pad))

    rows = flat_p.size // LANE
    p2d = flat_p.reshape(rows, LANE)
    t2d = flat_t.reshape(rows, LANE)

    # Row tile: as large as the conservative, all-generation-safe VMEM budget
    # allows; always a multiple of 8.
    tile_m = min(tile_m_max, _round_up(rows, SUBLANE))
    num_tiles = pl.cdiv(rows, tile_m)

    # Shard the reduction across 2 TensorCores (v7x); on 1-TC chips the
    # parallel axis simply runs sequentially.
    num_cores = 2 if num_tiles >= 2 else 1
    tiles_per_core = pl.cdiv(num_tiles, num_cores)

    # Clamp block indices into range when the per-core split overshoots the
    # real tile count; overshoot tiles are fully masked inside the kernel.
    if num_cores * tiles_per_core > num_tiles:
        def in_map(c, i):
            return (jnp.minimum(c * tiles_per_core + i, num_tiles - 1), 0)
    else:
        def in_map(c, i):
            return (c * tiles_per_core + i, 0)

    need_mask = (num_cores * tiles_per_core * tile_m) != rows

    kernel = functools.partial(
        _composite_loss_kernel,
        tile_m=tile_m,
        total_rows=rows,
        tiles_per_core=tiles_per_core,
        need_mask=need_mask,
    )

    sq_parts, ab_parts = pl.pallas_call(
        kernel,
        out_shape=(
            jax.ShapeDtypeStruct((num_cores, SUBLANE, LANE), jnp.float32),
            jax.ShapeDtypeStruct((num_cores, SUBLANE, LANE), jnp.float32),
        ),
        grid_spec=pltpu.PrefetchScalarGridSpec(
            num_scalar_prefetch=0,
            grid=(num_cores, tiles_per_core),
            in_specs=[
                pl.BlockSpec((tile_m, LANE), in_map),
                pl.BlockSpec((tile_m, LANE), in_map),
            ],
            out_specs=[
                pl.BlockSpec((1, SUBLANE, LANE), lambda c, i: (c, 0, 0)),
                pl.BlockSpec((1, SUBLANE, LANE), lambda c, i: (c, 0, 0)),
            ],
        ),
        compiler_params=pltpu.CompilerParams(
            dimension_semantics=("parallel", "arbitrary"),
        ),
    )(p2d, t2d)

    # Single cross-lane reduce, outside the hot loop.
    sq_sum = jnp.sum(sq_parts)
    ab_sum = jnp.sum(ab_parts)
    mse = sq_sum / n_elems
    mae = ab_sum / n_elems
    return weights[0] * mse + weights[1] * mae


def _ref_loss(pred, target, w=(0.7, 0.3)):
    d = pred.astype(jnp.float32) - target.astype(jnp.float32)
    return w[0] * jnp.mean(d * d) + w[1] * jnp.mean(jnp.abs(d))


if __name__ == "__main__":
    key = jax.random.PRNGKey(0)

    # Primary example: NCHW batch=2, channels=4, spatial=16x16.
    k1, k2 = jax.random.split(key)
    pred = jax.random.normal(k1, (2, 4, 16, 16), dtype=jnp.float32)
    target = jax.random.normal(k2, (2, 4, 16, 16), dtype=jnp.float32)
    loss = composite_loss(pred, target)
    jax.block_until_ready(loss)
    ref = _ref_loss(pred, target)
    assert jnp.allclose(loss, ref, rtol=1e-5, atol=1e-6), (loss, ref)

    # Extra small checks exercising the multi-tile / 2-core / masked paths.
    extra_cases = [
        ((2, 8, 16, 16), 8),            # multi-tile, 2-core split, no mask
        ((2, 6, 16, 16), 8),            # clamped block index + masked tile
        ((2, 4, 10, 16), TILE_M_MAX),   # partial edge block + row mask
        ((3, 5, 7, 11), TILE_M_MAX),    # element count not multiple of 128
    ]
    for shape, tm in extra_cases:
        key, ka, kb = jax.random.split(key, 3)
        p = jax.random.normal(ka, shape, dtype=jnp.float32)
        t = jax.random.normal(kb, shape, dtype=jnp.float32)
        out = composite_loss(p, t, tile_m_max=tm)
        jax.block_until_ready(out)
        r = _ref_loss(p, t)
        assert jnp.allclose(out, r, rtol=1e-5, atol=1e-6), (shape, tm, out, r)

    print("KERNEL_OK")
</pallas_src>

<mosaic_0001>
module attributes {stable_mosaic.version = 11 : i64} {
  func.func @_composite_loss_kernel(%arg0: i32, %arg1: i32, %arg2: memref<16x128xf32, #tpu.memory_space<vmem>>, %arg3: memref<16x128xf32, #tpu.memory_space<vmem>>, %arg4: memref<1x8x128xf32, #tpu.memory_space<vmem>>, %arg5: memref<1x8x128xf32, #tpu.memory_space<vmem>>) attributes {dimension_semantics = [#tpu.dimension_semantics<parallel>, #tpu.dimension_semantics<arbitrary>], iteration_bounds = array<i64: 1, 1>, scalar_prefetch = 0 : i64, scratch_operands = 0 : i64, tpu.core_type = #tpu.core_type<tc>, window_params = [{transform_indices = @transform_0, window_bounds = array<i64: 16, 128>}, {transform_indices = @transform_1, window_bounds = array<i64: 16, 128>}, {transform_indices = @transform_2, window_bounds = array<i64: 1, 8, 128>}, {transform_indices = @transform_3, window_bounds = array<i64: 1, 8, 128>}]} {
    %c0_i32 = arith.constant 0 : i32
    %0 = arith.cmpi eq, %arg1, %c0_i32 : i32
    %1 = arith.extui %0 : i1 to i32
    %c0_i32_0 = arith.constant 0 : i32
    %2 = arith.cmpi ne, %1, %c0_i32_0 : i32
    scf.if %2 {
      %cst_17 = arith.constant 0.000000e+00 : f32
      %19 = vector.broadcast %cst_17 : f32 to vector<1x8x128xf32>
      %c0_18 = arith.constant 0 : index
      %c0_19 = arith.constant 0 : index
      %c0_20 = arith.constant 0 : index
      %20 = vector.load %arg4[%c0_18, %c0_19, %c0_20] : memref<1x8x128xf32, #tpu.memory_space<vmem>>, vector<1x8x128xf32>
      tpu.vector_store %arg4[%c0_18, %c0_19, %c0_20], %19 {strides = array<i32>} : memref<1x8x128xf32, #tpu.memory_space<vmem>>, vector<1x8x128xf32>,
      %cst_21 = arith.constant 0.000000e+00 : f32
      %21 = vector.broadcast %cst_21 : f32 to vector<1x8x128xf32>
      %c0_22 = arith.constant 0 : index
      %c0_23 = arith.constant 0 : index
      %c0_24 = arith.constant 0 : index
      %22 = vector.load %arg5[%c0_22, %c0_23, %c0_24] : memref<1x8x128xf32, #tpu.memory_space<vmem>>, vector<1x8x128xf32>
      tpu.vector_store %arg5[%c0_22, %c0_23, %c0_24], %21 {strides = array<i32>} : memref<1x8x128xf32, #tpu.memory_space<vmem>>, vector<1x8x128xf32>,
    } else {
    }
    %c0 = arith.constant 0 : index
    %c0_1 = arith.constant 0 : index
    %3 = vector.load %arg2[%c0, %c0_1] : memref<16x128xf32, #tpu.memory_space<vmem>>, vector<16x128xf32>
    %c0_2 = arith.constant 0 : index
    %c0_3 = arith.constant 0 : index
    %4 = vector.load %arg3[%c0_2, %c0_3] : memref<16x128xf32, #tpu.memory_space<vmem>>, vector<16x128xf32>
    %5 = arith.subf %3, %4 : vector<16x128xf32>
    %6 = vector.shape_cast %5 : vector<16x128xf32> to vector<2x8x128xf32>
    %c0_4 = arith.constant 0 : index
    %c0_5 = arith.constant 0 : index
    %c0_6 = arith.constant 0 : index
    %7 = vector.load %arg4[%c0_4, %c0_5, %c0_6] : memref<1x8x128xf32, #tpu.memory_space<vmem>>, vector<1x8x128xf32>
    %8 = arith.mulf %6, %6 : vector<2x8x128xf32>
    %cst = arith.constant dense<0.000000e+00> : vector<8x128xf32>
    %9 = vector.multi_reduction <add>, %8, %cst [0] : vector<2x8x128xf32> to vector<8x128xf32>
    %10 = vector.shape_cast %9 : vector<8x128xf32> to vector<1x8x128xf32>
    %11 = arith.addf %7, %10 : vector<1x8x128xf32>
    %c0_7 = arith.constant 0 : index
    %c0_8 = arith.constant 0 : index
    %c0_9 = arith.constant 0 : index
    %12 = vector.load %arg4[%c0_7, %c0_8, %c0_9] : memref<1x8x128xf32, #tpu.memory_space<vmem>>, vector<1x8x128xf32>
    tpu.vector_store %arg4[%c0_7, %c0_8, %c0_9], %11 {strides = array<i32>} : memref<1x8x128xf32, #tpu.memory_space<vmem>>, vector<1x8x128xf32>,
    %c0_10 = arith.constant 0 : index
    %c0_11 = arith.constant 0 : index
    %c0_12 = arith.constant 0 : index
    %13 = vector.load %arg5[%c0_10, %c0_11, %c0_12] : memref<1x8x128xf32, #tpu.memory_space<vmem>>, vector<1x8x128xf32>
    %14 = math.absf %6 : vector<2x8x128xf32>
    %cst_13 = arith.constant dense<0.000000e+00> : vector<8x128xf32>
    %15 = vector.multi_reduction <add>, %14, %cst_13 [0] : vector<2x8x128xf32> to vector<8x128xf32>
    %16 = vector.shape_cast %15 : vector<8x128xf32> to vector<1x8x128xf32>
    %17 = arith.addf %13, %16 : vector<1x8x128xf32>
    %c0_14 = arith.constant 0 : index
    %c0_15 = arith.constant 0 : index
    %c0_16 = arith.constant 0 : index
    %18 = vector.load %arg5[%c0_14, %c0_15, %c0_16] : memref<1x8x128xf32, #tpu.memory_space<vmem>>, vector<1x8x128xf32>
    tpu.vector_store %arg5[%c0_14, %c0_15, %c0_16], %17 {strides = array<i32>} : memref<1x8x128xf32, #tpu.memory_space<vmem>>, vector<1x8x128xf32>,
    return
  }
  func.func @transform_0(%arg0: i32, %arg1: i32) -> (i32, i32) {
    %c1_i32 = arith.constant 1 : i32
    %0 = arith.muli %arg0, %c1_i32 : i32
    %1 = arith.addi %0, %arg1 : i32
    %c0_i32 = arith.constant 0 : i32
    %c0_i32_0 = arith.constant 0 : i32
    return %1, %c0_i32 : i32, i32
  }
  func.func @transform_1(%arg0: i32, %arg1: i32) -> (i32, i32) {
    %c1_i32 = arith.constant 1 : i32
    %0 = arith.muli %arg0, %c1_i32 : i32
    %1 = arith.addi %0, %arg1 : i32
    %c0_i32 = arith.constant 0 : i32
    %c0_i32_0 = arith.constant 0 : i32
    return %1, %c0_i32 : i32, i32
  }
  func.func @transform_2(%arg0: i32, %arg1: i32) -> (i32, i32, i32) {
    %c0_i32 = arith.constant 0 : i32
    %c0_i32_0 = arith.constant 0 : i32
    %c0_i32_1 = arith.constant 0 : i32
    return %arg0, %c0_i32, %c0_i32_0 : i32, i32, i32
  }
  func.func @transform_3(%arg0: i32, %arg1: i32) -> (i32, i32, i32) {
    %c0_i32 = arith.constant 0 : i32
    %c0_i32_0 = arith.constant 0 : i32
    %c0_i32_1 = arith.constant 0 : i32
    return %arg0, %c0_i32, %c0_i32_0 : i32, i32, i32
  }
}

</mosaic_0001>

<llo_original>
// kernel: composite_loss.1
$region0: #{composite_loss.1}
  #allocation0 [shape = 'u32[]', space=smem, size = 0x4, offset = 0x4, fixed_abs, tag = 'smem constant byte address 0x4 - core index']
  #allocation1 [shape = 'u32[72,128]{1,0:T(1,128)}', space=vmem, size = 0x9000, scoped, tag = 'internal scratch']
  %s0 = inlined_call_operand.vmem [shape: f32[16,128], index: 0, kind: input, shape index: {}]
  %s1 = inlined_call_operand.vmem [shape: f32[16,128], index: 1, kind: input, shape index: {}]
  %s2 = inlined_call_operand.vmem [shape: f32[1,8,128], index: 2, kind: output, shape index: {0}]
  %s3 = inlined_call_operand.vmem [shape: f32[1,8,128], index: 3, kind: output, shape index: {1}]
  %4 = xla_tuple %s2, %s3
  %s5 = sld [smem:[#allocation0]]
  $region30: #{composite_loss.1} parent=0
    _
  %s7 = ssub.s32 1, %s5
  %s8 = scalar_select 0, %s7, %s5
  // Predicated region
  $region2: #{composite_loss.1} parent=0 // pred_check
    _
  $region3: #{composite_loss.1} parent=0 // pred_check_branch
    %10 = sbr.rel (0) target = $region5
  $region4: #{composite_loss.1} parent=0 // pred_region
    %s11 = sadd.s32 0, 0
    %s12 = smul.u32 2, %s11
    %p13 = scmp.lt.s32.totalorder %s12, 1
    %s14 = scalar_select %p13, %s12, 1
    %s15 = smul.addr %s14, 8
    %s16 = scalar_lea.vmem %s0, %s15
    %s17 = sadd.s32 0, 0
    %s18 = smul.u32 2, %s17
  $region5: #{composite_loss.1} parent=0 // pred_fallthru
    _
  // Predicated region
  $region6: #{composite_loss.1} parent=0 // pred_check
    _
  $region7: #{composite_loss.1} parent=0 // pred_check_branch
    %20 = sbr.rel (0) target = $region9
  $region8: #{composite_loss.1} parent=0 // pred_region
    %s21 = sadd.s32 0, 0
    %s22 = smul.u32 2, %s21
    %p23 = scmp.lt.s32.totalorder %s22, 1
    %s24 = scalar_select %p23, %s22, 1
    %s25 = smul.addr %s24, 8
    %s26 = scalar_lea.vmem %s1, %s25
    %s27 = sadd.s32 0, 0
    %s28 = smul.u32 2, %s27
  $region9: #{composite_loss.1} parent=0 // pred_fallthru
    _
  %s29 = sadd.s32 0, 0
  %s30 = smul.u32 2, %s29
  %p31 = scmp.lt.s32.totalorder %s30, 1
  %s32 = scalar_select %p31, %s30, 1
  %s33 = smul.addr %s32, 8
  %s34 = scalar_lea.vmem %s0, %s33
  %s35 = sadd.s32 0, 0
  %s36 = smul.u32 2, %s35
  %p37 = scmp.lt.s32.totalorder %s36, 1
  %s38 = scalar_select %p37, %s36, 1
  %s39 = smul.addr %s38, 8
  %s40 = scalar_lea.vmem %s1, %s39
  %s41 = sadd.s32 0, 0
  %s42 = smul.u32 2, %s41
  %p43 = scmp.lt.s32.totalorder %s42, 1
  %s44 = scalar_select %p43, %s42, 1
  %s45 = smul.addr %s44, 8
  %s46 = scalar_lea.vmem %s0, %s45
  %s47 = sadd.s32 0, 0
  %s48 = smul.u32 2, %s47
  %s49 = sadd.s32 0, 0
  %s50 = smul.u32 2, %s49
  %p51 = scmp.lt.s32.totalorder %s50, 1
  %s52 = scalar_select %p51, %s50, 1
  %s53 = smul.addr %s52, 8
  %s54 = scalar_lea.vmem %s1, %s53
  %s55 = sadd.s32 0, 0
  %s56 = smul.u32 2, %s55
  %p57 = scmp.eq.s32.totalorder 0, 0
  // Predicated region
  $region10: #{composite_loss.1} parent=0 // pred_check
    %p58 = pneg %p57
  $region11: #{composite_loss.1} parent=0 // pred_check_branch
    %60 = sbr.rel (%p58) target = $region13
  $region12: #{composite_loss.1} parent=0 // pred_region
    %61 = vst [vmem:[%s2] sm:$0xff] 0.0
    %62 = vst [vmem:[%s3] sm:$0xff] 0.0
  $region13: #{composite_loss.1} parent=0 // pred_fallthru
    _
  %v63 = vld [vmem:[%s46] sm:$0xff]
  %v64 = vld [vmem:[%s46 + $0x8] sm:$0xff]
  %v65 = vld [vmem:[%s54] sm:$0xff]
  %v66 = vld [vmem:[%s54 + $0x8] sm:$0xff]
  %v67 = vsub.f32 %v63, %v65
  %v68 = vsub.f32 %v64, %v66
  %v69 = vld [vmem:[%s2] sm:$0xff]
  %v70 = vmul.f32 %v67, %v67
  %v71 = vmul.f32 %v68, %v68
  %v72 = vadd.f32 %v70, %v71
  %v73 = vadd.f32 %v69, %v72
  %74 = vst [vmem:[%s2] sm:$0xff] %v73
  %v75 = vld [vmem:[%s3] sm:$0xff]
  %v76 = vand.u32 2147483647, %v67
  %v77 = vand.u32 2147483647, %v68
  %v78 = vadd.f32 %v76, %v77
  %v79 = vadd.f32 %v75, %v78
  %80 = vst [vmem:[%s3] sm:$0xff] %v79
  // Predicated region
  $region14: #{composite_loss.1} parent=0 // pred_check
    _
  $region15: #{composite_loss.1} parent=0 // pred_check_branch
    %82 = sbr.rel (0) target = $region17
  $region16: #{composite_loss.1} parent=0 // pred_region
    _
  $region17: #{composite_loss.1} parent=0 // pred_fallthru
    _
  // Predicated region
  $region18: #{composite_loss.1} parent=0 // pred_check
    _
  $region19: #{composite_loss.1} parent=0 // pred_check_branch
    %84 = sbr.rel (0) target = $region21
  $region20: #{composite_loss.1} parent=0 // pred_region
    _
  $region21: #{composite_loss.1} parent=0 // pred_fallthru
    _
  // Predicated region
  $region22: #{composite_loss.1} parent=0 // pred_check
    _
  $region23: #{composite_loss.1} parent=0 // pred_check_branch
    %86 = sbr.rel (0) target = $region25
  $region24: #{composite_loss.1} parent=0 // pred_region
    _
  $region25: #{composite_loss.1} parent=0 // pred_fallthru
    _
  // Predicated region
  $region26: #{composite_loss.1} parent=0 // pred_check
    _
  $region27: #{composite_loss.1} parent=0 // pred_check_branch
    %88 = sbr.rel (0) target = $region29
  $region28: #{composite_loss.1} parent=0 // pred_region
    _
  $region29: #{composite_loss.1} parent=0 // pred_fallthru
    _

</llo_original>
